<compile_context>
chip_gen: v5e
topology: v5e:2x2
jax: 0.10.0
libtpu: 0.0.40
codegen_flags: <defaults>
</compile_context>

<pallas_src>
import functools

import jax
import jax.numpy as jnp
from jax.experimental import pallas as pl
from jax.experimental.pallas import tpu as pltpu


def _round_up(x, m):
    return ((x + m - 1) // m) * m


def _chip_budgets():
    """Per-generation VMEM budgets (bytes).

    v5e/v6e have 128 MiB of VMEM per TensorCore -> large tiles; v7x has 64 MiB
    per TensorCore and the 'parallel' grid axis gives each of the 2 TCs its own
    scratch + double buffers, so stay conservative there (also the safe default
    when the backend cannot be queried, e.g. interpret mode)."""
    vmem_bytes = None
    try:
        vmem_bytes = int(pltpu.get_tpu_info().vmem_capacity_bytes)
    except Exception:
        vmem_bytes = None
    if vmem_bytes is not None and vmem_bytes >= 100 * 2**20:  # v5e / v6e
        return dict(img_budget=24 * 2**20, sel_budget=16 * 2**20,
                    tn_cap=4096, tm_cap=512, vmem_cap=96 * 2**20)
    # v7x (64 MiB / TC) or unknown backend.
    return dict(img_budget=8 * 2**20, sel_budget=6 * 2**20,
                tn_cap=2048, tm_cap=256, vmem_cap=48 * 2**20)


def _rotation_kernel(H, W, TN, pixel_axis, amortize_build,
                     trig_ref, img_ref, out_ref, sel_ref):
    """One grid step.

    trig_ref: SMEM f32[2] = [cos(a), sin(a)]
    img_ref : VMEM dtype[TM, HW_pad]   TM flattened image planes
    out_ref : VMEM dtype[TM, TN]
    sel_ref : VMEM dtype[HW_pad, TN]   persistent one-hot gather matrix (scratch)
    """
    HW = H * W
    plane_axis = 1 - pixel_axis
    # NOTE: pl.program_id must be bound at the top level of the kernel body;
    # binding it inside a pl.when/lax.cond branch breaks interpret-mode lowering.
    pix_id = pl.program_id(pixel_axis)
    pln_id = pl.program_id(plane_axis)
    base_px = pix_id * TN
    cos_a = trig_ref[0]
    sin_a = trig_ref[1]

    def _build_selector():
        # Output-pixel index of each lane of this pixel block.
        lane = jax.lax.broadcasted_iota(jnp.int32, (1, TN), 1)
        p = lane + base_px
        pf = p.astype(jnp.float32)
        wf = jnp.float32(W)
        # x = p mod W, y = p div W via f32 divide + exact fix-up (exact for
        # HW < 2**24; avoids integer div/mod which has no fast VPU path).
        y_out = jnp.floor(pf / wf)
        x_out = pf - y_out * wf
        y_out = jnp.where(x_out >= wf, y_out + 1.0,
                          jnp.where(x_out < 0.0, y_out - 1.0, y_out))
        x_out = pf - y_out * wf

        # Inverse-rotation source coordinates (rotate about the image centre,
        # nearest interpolation, zero fill outside the source image).
        xb = x_out + (0.5 - W / 2.0)
        yb = y_out + (0.5 - H / 2.0)
        ix = xb * cos_a - yb * sin_a + (W - 1) / 2.0
        iy = xb * sin_a + yb * cos_a + (H - 1) / 2.0
        ixr = jnp.floor(ix + 0.5).astype(jnp.int32)
        iyr = jnp.floor(iy + 0.5).astype(jnp.int32)
        valid = ((ixr >= 0) & (ixr <= W - 1) & (iyr >= 0) & (iyr <= H - 1)
                 & (p < HW))                                 # mask lane padding
        src = jnp.where(valid, iyr * W + ixr, -1)            # -1 -> zero fill

        # SelT[q, p] = (q == src[p]); q is a native sublane iota (no div/mod).
        q = jax.lax.broadcasted_iota(jnp.int32, sel_ref.shape, 0)
        sel_ref[...] = (q == src).astype(sel_ref.dtype)

    if amortize_build:
        # Plane axis is the inner "arbitrary" axis: build the one-hot selector
        # once per pixel block and reuse it across all plane blocks.
        pl.when(pln_id == 0)(_build_selector)
    else:
        # Plane axis is the "parallel" axis (small image / big batch): every step
        # rebuilds its (cheap) selector so each TensorCore stays self-contained.
        _build_selector()

    # Gather-as-matmul on the MXU: out[b, p] = img[b, src[p]]  (0 if invalid).
    out_ref[...] = jnp.dot(
        img_ref[...], sel_ref[...], preferred_element_type=jnp.float32
    ).astype(out_ref.dtype)


def _build_rotation_call(NC_pad, HW_pad, H, W, TM, TN, dtype, pixel_axis, vmem_cap):
    n_plane_blocks = NC_pad // TM
    n_pixel_blocks = HW_pad // TN
    amortize_build = (pixel_axis == 0)

    kernel = functools.partial(_rotation_kernel, H, W, TN, pixel_axis, amortize_build)

    itemsize = jnp.dtype(dtype).itemsize
    sel_bytes = HW_pad * TN * itemsize
    img_block_bytes = TM * HW_pad * itemsize
    out_block_bytes = TM * TN * itemsize
    # 'need' already counts double-buffering of the pipelined operands; add a
    # small fixed margin for compiler-internal scratch (do NOT multiply by 2).
    need = sel_bytes + 2 * (img_block_bytes + out_block_bytes)
    vmem_limit = int(min(vmem_cap, max(16 * 2**20, need + 4 * 2**20)))

    if pixel_axis == 0:
        # Pixel blocks outer ("parallel"), plane blocks inner ("arbitrary").
        grid = (n_pixel_blocks, n_plane_blocks)
        img_spec = pl.BlockSpec((TM, HW_pad), lambda j, i: (i, 0))
        out_spec = pl.BlockSpec((TM, TN), lambda j, i: (i, j))
    else:
        # Plane blocks outer ("parallel"), single pixel block inner.
        grid = (n_plane_blocks, n_pixel_blocks)
        img_spec = pl.BlockSpec((TM, HW_pad), lambda i, j: (i, 0))
        out_spec = pl.BlockSpec((TM, TN), lambda i, j: (i, j))

    grid_spec = pltpu.PrefetchScalarGridSpec(
        num_scalar_prefetch=0,
        grid=grid,
        in_specs=[
            pl.BlockSpec(memory_space=pltpu.MemorySpace.SMEM),   # [cos, sin]
            img_spec,                                            # image planes
        ],
        out_specs=out_spec,
        scratch_shapes=[pltpu.VMEM((HW_pad, TN), dtype)],
    )

    return pl.pallas_call(
        kernel,
        out_shape=jax.ShapeDtypeStruct((NC_pad, HW_pad), dtype),
        grid_spec=grid_spec,
        compiler_params=pltpu.CompilerParams(
            dimension_semantics=("parallel", "arbitrary"),
            vmem_limit_bytes=vmem_limit,
        ),
    )


def rotation_forward(image, angle_deg):
    """Equivalent of rotation.forward(image) for a given sampled angle
    (degrees, counter-clockwise).  image: [N, C, H, W], dtype preserved."""
    N, C, H, W = image.shape
    orig_dtype = image.dtype
    # Integer images (e.g. uint8): compute in f32 — the nearest-neighbour gather
    # only copies values, so the round trip back to the original dtype is exact.
    if jnp.issubdtype(orig_dtype, jnp.floating):
        compute_dtype = orig_dtype
    else:
        compute_dtype = jnp.float32
    itemsize = jnp.dtype(compute_dtype).itemsize

    NC, HW = N * C, H * W
    budgets = _chip_budgets()
    HW_pad = _round_up(HW, 128)

    # --- plane tile (MXU M dim) -----------------------------------------------
    NC8 = _round_up(NC, 8)
    if NC8 * HW_pad * itemsize <= budgets["img_budget"]:
        # Single plane block: the image block index never changes, so the image
        # is fetched from HBM once and stays VMEM-resident for all pixel blocks.
        TM = NC8
    else:
        tm_max = max(8, min(budgets["tm_cap"],
                            (budgets["img_budget"] // (HW_pad * itemsize)) // 8 * 8))
        # Bound plane padding: among tile heights near tm_max pick the one that
        # wastes the fewest padded plane rows.
        best_tm = tm_max
        best_pad = _round_up(NC, tm_max) - NC
        t = tm_max
        while t >= max(8, tm_max // 2):
            pad = _round_up(NC, t) - NC
            if pad < best_pad:
                best_tm, best_pad = t, pad
            t -= 8
        TM = best_tm
    NC_pad = _round_up(NC, TM)

    # --- pixel tile (MXU N dim / selector slab width) ---------------------------
    TN = min(HW_pad, budgets["tn_cap"],
             max(128, (budgets["sel_budget"] // (HW_pad * itemsize)) // 128 * 128))
    while HW_pad % TN:
        TN -= 128

    n_pixel_blocks = HW_pad // TN
    n_plane_blocks = NC_pad // TM
    # Small image / large batch: with a single pixel block the pixel axis cannot
    # feed both v7x TensorCores, so parallelise over plane blocks instead.
    pixel_axis = 1 if (n_pixel_blocks == 1 and n_plane_blocks > 1) else 0

    # --- angle-dependent scalars (SMEM) -----------------------------------------
    a = jnp.deg2rad(jnp.asarray(angle_deg, jnp.float32))
    trig = jnp.stack([jnp.cos(a), jnp.sin(a)]).astype(jnp.float32)

    # --- flatten + pad image planes ---------------------------------------------
    img_flat = image.astype(compute_dtype).reshape(NC, HW)
    img_flat = jnp.pad(img_flat, ((0, NC_pad - NC), (0, HW_pad - HW)))

    call = _build_rotation_call(NC_pad, HW_pad, H, W, TM, TN, compute_dtype,
                                pixel_axis, budgets["vmem_cap"])
    out_flat = call(trig, img_flat)
    out = out_flat[:NC, :HW].reshape(N, C, H, W)
    return out.astype(orig_dtype)


def rotation_reference(image, angle_deg):
    """Pure-JAX reference of the same nearest-neighbour rotation."""
    N, C, H, W = image.shape
    a = jnp.deg2rad(jnp.asarray(angle_deg, jnp.float32))
    yy, xx = jnp.meshgrid(jnp.arange(H), jnp.arange(W), indexing="ij")
    xb = xx + 0.5 - W / 2.0
    yb = yy + 0.5 - H / 2.0
    ix = xb * jnp.cos(a) - yb * jnp.sin(a) + (W - 1) / 2.0
    iy = xb * jnp.sin(a) + yb * jnp.cos(a) + (H - 1) / 2.0
    ixr = jnp.floor(ix + 0.5).astype(jnp.int32)
    iyr = jnp.floor(iy + 0.5).astype(jnp.int32)
    valid = (ixr >= 0) & (ixr < W) & (iyr >= 0) & (iyr < H)
    ixc = jnp.clip(ixr, 0, W - 1)
    iyc = jnp.clip(iyr, 0, H - 1)
    gathered = image[:, :, iyc, ixc]
    return jnp.where(valid[None, None], gathered, 0).astype(image.dtype)


class Rotation:
    """Stateless analogue of the PyTorch module (theta = max |rotation| in deg)."""

    def __init__(self, theta=90.0):
        self.theta = float(theta)

    def forward(self, image, key):
        # np.random.uniform(-theta, theta) in the original; explicit key here.
        angle = jax.random.uniform(
            key, (), minval=-self.theta, maxval=self.theta, dtype=jnp.float32
        )
        return rotation_forward(image, angle), angle


if __name__ == "__main__":
    key = jax.random.PRNGKey(0)
    k_img, k_angle = jax.random.split(key)

    # Small NCHW image batch.
    N, C, H, W = 2, 4, 16, 16
    image = jax.random.uniform(k_img, (N, C, H, W), dtype=jnp.float32)

    module = Rotation(theta=90.0)
    out, angle = module.forward(image, k_angle)
    out = jax.block_until_ready(out)

    ref = rotation_reference(image, angle)
    assert out.shape == image.shape and out.dtype == image.dtype
    assert jnp.allclose(out, ref, atol=1e-5, rtol=1e-5), "mismatch vs reference"

    print("KERNEL_OK")
</pallas_src>

<mosaic_0001>
module attributes {stable_mosaic.version = 11 : i64} {
  func.func @_rotation_kernel(%arg0: i32, %arg1: i32, %arg2: memref<2xf32, #tpu.memory_space<smem>>, %arg3: memref<8x256xf32, #tpu.memory_space<vmem>>, %arg4: memref<8x256xf32, #tpu.memory_space<vmem>>, %arg5: memref<256x256xf32, #tpu.memory_space<vmem>>) attributes {dimension_semantics = [#tpu.dimension_semantics<parallel>, #tpu.dimension_semantics<arbitrary>], iteration_bounds = array<i64: 1, 1>, scalar_prefetch = 0 : i64, scratch_operands = 1 : i64, tpu.core_type = #tpu.core_type<tc>, window_params = [{transform_indices = @transform_0, window_bounds = array<i64: 2>}, {transform_indices = @transform_1, window_bounds = array<i64: 8, 256>}, {transform_indices = @transform_2, window_bounds = array<i64: 8, 256>}]} {
    %c256_i32 = arith.constant 256 : i32
    %0 = arith.muli %arg0, %c256_i32 : i32
    %c0 = arith.constant 0 : index
    %1 = memref.load %arg2[%c0] : memref<2xf32, #tpu.memory_space<smem>>
    %c1 = arith.constant 1 : index
    %2 = memref.load %arg2[%c1] : memref<2xf32, #tpu.memory_space<smem>>
    %c0_i32 = arith.constant 0 : i32
    %3 = arith.cmpi eq, %arg1, %c0_i32 : i32
    %4 = arith.extui %3 : i1 to i32
    %c0_i32_0 = arith.constant 0 : i32
    %5 = arith.cmpi ne, %4, %c0_i32_0 : i32
    scf.if %5 {
      %10 = tpu.iota {dimensions = array<i32: 1>} : vector<1x256xi32>
      %11 = vector.broadcast %0 : i32 to vector<1x256xi32>
      %12 = arith.addi %10, %11 : vector<1x256xi32>
      %13 = arith.sitofp %12 : vector<1x256xi32> to vector<1x256xf32>
      %cst_7 = arith.constant 1.600000e+01 : f32
      %14 = vector.broadcast %cst_7 : f32 to vector<1x256xf32>
      %15 = arith.divf %13, %14 : vector<1x256xf32>
      %16 = math.floor %15 : vector<1x256xf32>
      %cst_8 = arith.constant 1.600000e+01 : f32
      %17 = vector.broadcast %cst_8 : f32 to vector<1x256xf32>
      %18 = arith.mulf %16, %17 : vector<1x256xf32>
      %19 = arith.subf %13, %18 : vector<1x256xf32>
      %cst_9 = arith.constant 1.600000e+01 : f32
      %20 = vector.broadcast %cst_9 : f32 to vector<1x256xf32>
      %21 = arith.cmpf oge, %19, %20 : vector<1x256xf32>
      %cst_10 = arith.constant 1.000000e+00 : f32
      %22 = vector.broadcast %cst_10 : f32 to vector<1x256xf32>
      %23 = arith.addf %16, %22 : vector<1x256xf32>
      %cst_11 = arith.constant 0.000000e+00 : f32
      %24 = vector.broadcast %cst_11 : f32 to vector<1x256xf32>
      %25 = arith.cmpf olt, %19, %24 : vector<1x256xf32>
      %cst_12 = arith.constant 1.000000e+00 : f32
      %26 = vector.broadcast %cst_12 : f32 to vector<1x256xf32>
      %27 = arith.subf %16, %26 : vector<1x256xf32>
      %28 = arith.select %25, %27, %16 : vector<1x256xi1>, vector<1x256xf32>
      %29 = arith.select %21, %23, %28 : vector<1x256xi1>, vector<1x256xf32>
      %cst_13 = arith.constant 1.600000e+01 : f32
      %30 = vector.broadcast %cst_13 : f32 to vector<1x256xf32>
      %31 = arith.mulf %29, %30 : vector<1x256xf32>
      %32 = arith.subf %13, %31 : vector<1x256xf32>
      %cst_14 = arith.constant -7.500000e+00 : f32
      %33 = vector.broadcast %cst_14 : f32 to vector<1x256xf32>
      %34 = arith.addf %32, %33 : vector<1x256xf32>
      %cst_15 = arith.constant -7.500000e+00 : f32
      %35 = vector.broadcast %cst_15 : f32 to vector<1x256xf32>
      %36 = arith.addf %29, %35 : vector<1x256xf32>
      %37 = vector.broadcast %1 : f32 to vector<1x256xf32>
      %38 = arith.mulf %34, %37 : vector<1x256xf32>
      %39 = vector.broadcast %2 : f32 to vector<1x256xf32>
      %40 = arith.mulf %36, %39 : vector<1x256xf32>
      %41 = arith.subf %38, %40 : vector<1x256xf32>
      %cst_16 = arith.constant 7.500000e+00 : f32
      %42 = vector.broadcast %cst_16 : f32 to vector<1x256xf32>
      %43 = arith.addf %41, %42 : vector<1x256xf32>
      %44 = vector.broadcast %2 : f32 to vector<1x256xf32>
      %45 = arith.mulf %34, %44 : vector<1x256xf32>
      %46 = vector.broadcast %1 : f32 to vector<1x256xf32>
      %47 = arith.mulf %36, %46 : vector<1x256xf32>
      %48 = arith.addf %45, %47 : vector<1x256xf32>
      %cst_17 = arith.constant 7.500000e+00 : f32
      %49 = vector.broadcast %cst_17 : f32 to vector<1x256xf32>
      %50 = arith.addf %48, %49 : vector<1x256xf32>
      %cst_18 = arith.constant 5.000000e-01 : f32
      %51 = vector.broadcast %cst_18 : f32 to vector<1x256xf32>
      %52 = arith.addf %43, %51 : vector<1x256xf32>
      %53 = math.floor %52 : vector<1x256xf32>
      %54 = arith.fptosi %53 : vector<1x256xf32> to vector<1x256xi32>
      %cst_19 = arith.constant 5.000000e-01 : f32
      %55 = vector.broadcast %cst_19 : f32 to vector<1x256xf32>
      %56 = arith.addf %50, %55 : vector<1x256xf32>
      %57 = math.floor %56 : vector<1x256xf32>
      %58 = arith.fptosi %57 : vector<1x256xf32> to vector<1x256xi32>
      %c0_i32_20 = arith.constant 0 : i32
      %59 = vector.broadcast %c0_i32_20 : i32 to vector<1x256xi32>
      %60 = arith.cmpi sge, %54, %59 : vector<1x256xi32>
      %c15_i32 = arith.constant 15 : i32
      %61 = vector.broadcast %c15_i32 : i32 to vector<1x256xi32>
      %62 = arith.cmpi sle, %54, %61 : vector<1x256xi32>
      %63 = arith.andi %60, %62 : vector<1x256xi1>
      %c0_i32_21 = arith.constant 0 : i32
      %64 = vector.broadcast %c0_i32_21 : i32 to vector<1x256xi32>
      %65 = arith.cmpi sge, %58, %64 : vector<1x256xi32>
      %66 = arith.andi %63, %65 : vector<1x256xi1>
      %c15_i32_22 = arith.constant 15 : i32
      %67 = vector.broadcast %c15_i32_22 : i32 to vector<1x256xi32>
      %68 = arith.cmpi sle, %58, %67 : vector<1x256xi32>
      %69 = arith.andi %66, %68 : vector<1x256xi1>
      %c256_i32_23 = arith.constant 256 : i32
      %70 = vector.broadcast %c256_i32_23 : i32 to vector<1x256xi32>
      %71 = arith.cmpi slt, %12, %70 : vector<1x256xi32>
      %72 = arith.andi %69, %71 : vector<1x256xi1>
      %c16_i32 = arith.constant 16 : i32
      %73 = vector.broadcast %c16_i32 : i32 to vector<1x256xi32>
      %74 = arith.muli %58, %73 : vector<1x256xi32>
      %75 = arith.addi %74, %54 : vector<1x256xi32>
      %c-1_i32 = arith.constant -1 : i32
      %76 = vector.broadcast %c-1_i32 : i32 to vector<1x256xi32>
      %77 = arith.select %72, %75, %76 : vector<1x256xi1>, vector<1x256xi32>
      %78 = tpu.iota {dimensions = array<i32: 0>} : vector<256x256xi32>
      %79 = vector.broadcast %77 : vector<1x256xi32> to vector<256x256xi32>
      %80 = arith.cmpi eq, %78, %79 : vector<256x256xi32>
      %81 = arith.extui %80 : vector<256x256xi1> to vector<256x256xi32>
      %82 = arith.sitofp %81 : vector<256x256xi32> to vector<256x256xf32>
      %c0_24 = arith.constant 0 : index
      %c0_25 = arith.constant 0 : index
      %83 = vector.load %arg5[%c0_24, %c0_25] : memref<256x256xf32, #tpu.memory_space<vmem>>, vector<256x256xf32>
      tpu.vector_store %arg5[%c0_24, %c0_25], %82 {strides = array<i32>} : memref<256x256xf32, #tpu.memory_space<vmem>>, vector<256x256xf32>,
    } else {
    }
    %c0_1 = arith.constant 0 : index
    %c0_2 = arith.constant 0 : index
    %6 = vector.load %arg3[%c0_1, %c0_2] : memref<8x256xf32, #tpu.memory_space<vmem>>, vector<8x256xf32>
    %c0_3 = arith.constant 0 : index
    %c0_4 = arith.constant 0 : index
    %7 = vector.load %arg5[%c0_3, %c0_4] : memref<256x256xf32, #tpu.memory_space<vmem>>, vector<256x256xf32>
    %cst = arith.constant dense<0.000000e+00> : vector<8x256xf32>
    %8 = tpu.matmul %6, %7, %cst {dimension_numbers = #tpu.dot_dimension_numbers<[1], [0], [0], [1], [0, 0, 1, 1], [], []>} : vector<8x256xf32>, vector<256x256xf32>, vector<8x256xf32> -> vector<8x256xf32>
    %c0_5 = arith.constant 0 : index
    %c0_6 = arith.constant 0 : index
    %9 = vector.load %arg4[%c0_5, %c0_6] : memref<8x256xf32, #tpu.memory_space<vmem>>, vector<8x256xf32>
    tpu.vector_store %arg4[%c0_5, %c0_6], %8 {strides = array<i32>} : memref<8x256xf32, #tpu.memory_space<vmem>>, vector<8x256xf32>,
    return
  }
  func.func @transform_0(%arg0: i32, %arg1: i32) -> i32 {
    %c0_i32 = arith.constant 0 : i32
    %c0_i32_0 = arith.constant 0 : i32
    return %c0_i32 : i32
  }
  func.func @transform_1(%arg0: i32, %arg1: i32) -> (i32, i32) {
    %c0_i32 = arith.constant 0 : i32
    %c0_i32_0 = arith.constant 0 : i32
    return %arg1, %c0_i32 : i32, i32
  }
  func.func @transform_2(%arg0: i32, %arg1: i32) -> (i32, i32) {
    %c0_i32 = arith.constant 0 : i32
    return %arg1, %arg0 : i32, i32
  }
}

</mosaic_0001>

<llo_original>
// kernel: tpu_custom_call.1
$region0: #{tpu_custom_call.1}
  #allocation0 [shape = 'u32[]', space=smem, size = 0x4, offset = 0x4, fixed_abs, tag = 'smem constant byte address 0x4 - core index']
  #allocation1 [shape = 'u32[72,128]{1,0:T(1,128)}', space=vmem, size = 0x9000, scoped, tag = 'internal scratch']
  #allocation2 [shape = 'f32[256,256]{1,0:T(8,128)}', space=vmem, size = 0x40000, scoped, tag = 'scratch operand']
  %s0 = inlined_call_operand.hbm [shape: f32[2], index: 0, kind: input, shape index: {}]
  %s1 = inlined_call_operand.hbm [shape: f32[8,256], index: 1, kind: input, shape index: {}]
  %s2 = inlined_call_operand.hbm [shape: f32[8,256], index: 2, kind: output, shape index: {}]
  %s3 = sld [smem:[#allocation0]]
  $region30: #{tpu_custom_call.1} parent=0
    _
  %s5 = ssub.s32 1, %s3
  %s6 = scalar_select 0, %s5, %s3
  $region1: #{tpu_custom_call.1} parent=0
    #allocation3 [shape = 'u8[512]{0}', space=smem, size = 0x200, scoped, tag = 'input window, operand 0, single buffered']
    #allocation4 [shape = 's32[1]{0}', space=sflag, size = 0x4, scoped, tag = 'scoped memory for tpu_custom_call.1']
    #allocation5 [shape = 's32[1]{0}', space=sflag, size = 0x4, scoped, tag = 'scoped memory for tpu_custom_call.1']
    #allocation6 [shape = 's32[1]{0}', space=sflag, size = 0x4, scoped, tag = 'scoped memory for tpu_custom_call.1']
    #allocation7 [shape = 'u8[8192]{0}', space=vmem, size = 0x2000, scoped, tag = 'input window, operand 1, single buffered']
    #allocation8 [shape = 'u8[8192]{0}', space=vmem, size = 0x2000, scoped, tag = 'output window, operand 0, single buffered']
    %7 = vsyncpa [#allocation6], 0
    %8 = vsyncpa [#allocation4], 0
    %9 = vsyncpa [#allocation5], 0
    // Predicated region
    $region2: #{tpu_custom_call.1} parent=1 // pred_check
      _
    $region3: #{tpu_custom_call.1} parent=1 // pred_check_branch
      %11 = sbr.rel (0) target = $region5
    $region4: #{tpu_custom_call.1} parent=1 // pred_region
      %13 = vsyncadd [#allocation6], 0
      %s15 = sshll.u32 %s0, 4
      %s16 = int_to_ptr.hbm [resolvable:$true] %s15
      %18 = dma.hbm_to_smem %s16, 16, [#allocation3], [#allocation6]
    $region5: #{tpu_custom_call.1} parent=1 // pred_fallthru
      _
    // Predicated region
    $region6: #{tpu_custom_call.1} parent=1 // pred_check
      _
    $region7: #{tpu_custom_call.1} parent=1 // pred_check_branch
      %20 = sbr.rel (0) target = $region9
    $region8: #{tpu_custom_call.1} parent=1 // pred_region
      %22 = vsyncadd [#allocation4], 0
      %s24 = sshll.u32 %s1, 4
      %s25 = int_to_ptr.hbm [resolvable:$true] %s24
      %s26 = sshll.u32 [#allocation7], 4
      %s27 = int_to_ptr.vmem [resolvable:$true] %s26
      %29 = dma.hbm_to_vmem [thread:$0]  %s25, 256, %s27, [#allocation4]
    $region9: #{tpu_custom_call.1} parent=1 // pred_fallthru
      _
    // Predicated region
    $region10: #{tpu_custom_call.1} parent=1 // pred_check
      _
    $region11: #{tpu_custom_call.1} parent=1 // pred_check_branch
      %31 = sbr.rel (0) target = $region13
    $region12: #{tpu_custom_call.1} parent=1 // pred_region
      %33 = dma.done [#allocation6], 16
    $region13: #{tpu_custom_call.1} parent=1 // pred_fallthru
      _
    // Predicated region
    $region14: #{tpu_custom_call.1} parent=1 // pred_check
      _
    $region15: #{tpu_custom_call.1} parent=1 // pred_check_branch
      %35 = sbr.rel (0) target = $region17
    $region16: #{tpu_custom_call.1} parent=1 // pred_region
      %37 = dma.done [#allocation4], 256
    $region17: #{tpu_custom_call.1} parent=1 // pred_fallthru
      _
    %38 = sfence
    %s39 = smul.u32 0, 256
    %s40 = sld [smem:[#allocation3]]
    %s41 = sld [smem:[#allocation3 + $0x1]]
    %p42 = scmp.eq.s32.totalorder 0, 0
    // Predicated region
    $region18: #{tpu_custom_call.1} parent=1 // pred_check
      %p43 = pneg %p42
    $region19: #{tpu_custom_call.1} parent=1 // pred_check_branch
      %45 = sbr.rel (%p43) target = $region21
    $region20: #{tpu_custom_call.1} parent=1 // pred_region
      %v46 = vlaneseq
      %v47 = vand.u32 %v46, 127
      %v48 = vadd.s32 %v47, 128
      %v49 = vstv %s39
      %v50 = vadd.s32 %v47, %v49
      %v51 = vadd.s32 %v48, %v49
      %v52 = vcvt.s32.f32 %v50
      %v53 = vcvt.s32.f32 %v51
      %v54 = vrcp.pop 16.0
      %v55 = vmul.f32 16.0, %v54
      %v56 = vsub.f32 1.0, %v55
      %v57 = vmul.f32 %v54, %v56
      %v58 = vadd.f32 %v54, %v57
      %vm59 = vweird.f32 %v54
      %v60 = vsel %vm59, %v54, %v58
      %v61 = vmul.f32 %v52, %v60
      %v62 = vmul.f32 %v53, %v60
      %v63 = vfloor.f32 %v61
      %v64 = vfloor.f32 %v62
      %v65 = vmul.f32 %v63, 16.0
      %v66 = vmul.f32 %v64, 16.0
      %v67 = vsub.f32 %v52, %v65
      %v68 = vsub.f32 %v53, %v66
      %vm69 = vcmp.ge.f32.partialorder %v67, 16.0
      %vm70 = vcmp.ge.f32.partialorder %v68, 16.0
      %v71 = vadd.f32 %v63, 1.0
      %v72 = vadd.f32 %v64, 1.0
      %vm73 = vcmp.lt.f32.partialorder %v67, 0.0
      %vm74 = vcmp.lt.f32.partialorder %v68, 0.0
      %v75 = vsub.f32 %v63, 1.0
      %v76 = vsub.f32 %v64, 1.0
      %v77 = vsel %vm73, %v75, %v63
      %v78 = vsel %vm74, %v76, %v64
      %v79 = vsel %vm69, %v71, %v77
      %v80 = vsel %vm70, %v72, %v78
      %v81 = vmul.f32 %v79, 16.0
      %v82 = vmul.f32 %v80, 16.0
      %v83 = vsub.f32 %v52, %v81
      %v84 = vsub.f32 %v53, %v82
      %v85 = vadd.f32 %v83, -7.5
      %v86 = vadd.f32 %v84, -7.5
      %v87 = vadd.f32 %v79, -7.5
      %v88 = vadd.f32 %v80, -7.5
      %v89 = vstv %s40
      %v90 = vmul.f32 %v85, %v89
      %v91 = vmul.f32 %v86, %v89
      %v92 = vstv %s41
      %v93 = vmul.f32 %v87, %v92
      %v94 = vmul.f32 %v88, %v92
      %v95 = vsub.f32 %v90, %v93
      %v96 = vsub.f32 %v91, %v94
      %v97 = vadd.f32 %v95, 7.5
      %v98 = vadd.f32 %v96, 7.5
      %v99 = vmul.f32 %v85, %v92
      %v100 = vmul.f32 %v86, %v92
      %v101 = vmul.f32 %v87, %v89
      %v102 = vmul.f32 %v88, %v89
      %v103 = vadd.f32 %v99, %v101
      %v104 = vadd.f32 %v100, %v102
      %v105 = vadd.f32 %v103, 7.5
      %v106 = vadd.f32 %v104, 7.5
      %v107 = vadd.f32 %v97, 0.5
      %v108 = vadd.f32 %v98, 0.5
      %v109 = vfloor.f32 %v107
      %v110 = vfloor.f32 %v108
      %v111 = vcvt.f32.s32.to.zero.pseudo %v109
      %v112 = vcvt.f32.s32.to.zero.pseudo %v110
      %v113 = vadd.f32 %v105, 0.5
      %v114 = vadd.f32 %v106, 0.5
      %v115 = vfloor.f32 %v113
      %v116 = vfloor.f32 %v114
      %v117 = vcvt.f32.s32.to.zero.pseudo %v115
      %v118 = vcvt.f32.s32.to.zero.pseudo %v116
      %vm119 = vcmp.ge.s32.totalorder %v111, 0
      %vm120 = vcmp.ge.s32.totalorder %v112, 0
      %vm121 = vcmp.le.s32.totalorder %v111, 15
      %vm122 = vcmp.le.s32.totalorder %v112, 15
      %vm123 = vmand %vm119, %vm121
      %vm124 = vmand %vm120, %vm122
      %vm125 = vcmp.ge.s32.totalorder %v117, 0
      %vm126 = vcmp.ge.s32.totalorder %v118, 0
      %vm127 = vmand %vm123, %vm125
      %vm128 = vmand %vm124, %vm126
      %vm129 = vcmp.le.s32.totalorder %v117, 15
      %vm130 = vcmp.le.s32.totalorder %v118, 15
      %vm131 = vmand %vm127, %vm129
      %vm132 = vmand %vm128, %vm130
      %vm133 = vcmp.lt.s32.totalorder %v50, 256
      %vm134 = vcmp.lt.s32.totalorder %v51, 256
      %vm135 = vmand %vm131, %vm133
      %vm136 = vmand %vm132, %vm134
      %v137 = vmul.u32 %v117, 16
      %v138 = vmul.u32 %v118, 16
      %v139 = vadd.s32 %v137, %v111
      %v140 = vadd.s32 %v138, %v112
      %v141 = vsel %vm135, %v139, 4294967295
      %v142 = vsel %vm136, %v140, 4294967295
      %v143 = vlaneseq
      %v144 = vshrl.u32 %v143, 7
      %v145 = vadd.s32 %v144, 8
      %v146 = vadd.s32 %v144, 16
      %v147 = vadd.s32 %v144, 24
      %v148 = vadd.s32 %v144, 32
      %v149 = vadd.s32 %v144, 40
      %v150 = vadd.s32 %v144, 48
      %v151 = vadd.s32 %v144, 56
      %v152 = vadd.s32 %v144, 64
      %v153 = vadd.s32 %v144, 72
      %v154 = vadd.s32 %v144, 80
      %v155 = vadd.s32 %v144, 88
      %v156 = vadd.s32 %v144, 96
      %v157 = vadd.s32 %v144, 104
      %v158 = vadd.s32 %v144, 112
      %v159 = vadd.s32 %v144, 120
      %v160 = vadd.s32 %v144, 128
      %v161 = vadd.s32 %v144, 136
      %v162 = vadd.s32 %v144, 144
      %v163 = vadd.s32 %v144, 152
      %v164 = vadd.s32 %v144, 160
      %v165 = vadd.s32 %v144, 168
      %v166 = vadd.s32 %v144, 176
      %v167 = vadd.s32 %v144, 184
      %v168 = vadd.s32 %v144, 192
      %v169 = vadd.s32 %v144, 200
      %v170 = vadd.s32 %v144, 208
      %v171 = vadd.s32 %v144, 216
      %v172 = vadd.s32 %v144, 224
      %v173 = vadd.s32 %v144, 232
      %v174 = vadd.s32 %v144, 240
      %v175 = vadd.s32 %v144, 248
      %vm176 = vcmp.eq.s32.totalorder %v144, %v141
      %vm177 = vcmp.eq.s32.totalorder %v144, %v142
      %vm178 = vcmp.eq.s32.totalorder %v145, %v141
      %vm179 = vcmp.eq.s32.totalorder %v145, %v142
      %vm180 = vcmp.eq.s32.totalorder %v146, %v141
      %vm181 = vcmp.eq.s32.totalorder %v146, %v142
      %vm182 = vcmp.eq.s32.totalorder %v147, %v141
      %vm183 = vcmp.eq.s32.totalorder %v147, %v142
      %vm184 = vcmp.eq.s32.totalorder %v148, %v141
      %vm185 = vcmp.eq.s32.totalorder %v148, %v142
      %vm186 = vcmp.eq.s32.totalorder %v149, %v141
      %vm187 = vcmp.eq.s32.totalorder %v149, %v142
      %vm188 = vcmp.eq.s32.totalorder %v150, %v141
      %vm189 = vcmp.eq.s32.totalorder %v150, %v142
      %vm190 = vcmp.eq.s32.totalorder %v151, %v141
      %vm191 = vcmp.eq.s32.totalorder %v151, %v142
      %vm192 = vcmp.eq.s32.totalorder %v152, %v141
      %vm193 = vcmp.eq.s32.totalorder %v152, %v142
      %vm194 = vcmp.eq.s32.totalorder %v153, %v141
      %vm195 = vcmp.eq.s32.totalorder %v153, %v142
      %vm196 = vcmp.eq.s32.totalorder %v154, %v141
      %vm197 = vcmp.eq.s32.totalorder %v154, %v142
      %vm198 = vcmp.eq.s32.totalorder %v155, %v141
      %vm199 = vcmp.eq.s32.totalorder %v155, %v142
      %vm200 = vcmp.eq.s32.totalorder %v156, %v141
      %vm201 = vcmp.eq.s32.totalorder %v156, %v142
      %vm202 = vcmp.eq.s32.totalorder %v157, %v141
      %vm203 = vcmp.eq.s32.totalorder %v157, %v142
      %vm204 = vcmp.eq.s32.totalorder %v158, %v141
      %vm205 = vcmp.eq.s32.totalorder %v158, %v142
      %vm206 = vcmp.eq.s32.totalorder %v159, %v141
      %vm207 = vcmp.eq.s32.totalorder %v159, %v142
      %vm208 = vcmp.eq.s32.totalorder %v160, %v141
      %vm209 = vcmp.eq.s32.totalorder %v160, %v142
      %vm210 = vcmp.eq.s32.totalorder %v161, %v141
      %vm211 = vcmp.eq.s32.totalorder %v161, %v142
      %vm212 = vcmp.eq.s32.totalorder %v162, %v141
      %vm213 = vcmp.eq.s32.totalorder %v162, %v142
      %vm214 = vcmp.eq.s32.totalorder %v163, %v141
      %vm215 = vcmp.eq.s32.totalorder %v163, %v142
      %vm216 = vcmp.eq.s32.totalorder %v164, %v141
      %vm217 = vcmp.eq.s32.totalorder %v164, %v142
      %vm218 = vcmp.eq.s32.totalorder %v165, %v141
      %vm219 = vcmp.eq.s32.totalorder %v165, %v142
      %vm220 = vcmp.eq.s32.totalorder %v166, %v141
      %vm221 = vcmp.eq.s32.totalorder %v166, %v142
      %vm222 = vcmp.eq.s32.totalorder %v167, %v141
      %vm223 = vcmp.eq.s32.totalorder %v167, %v142
      %vm224 = vcmp.eq.s32.totalorder %v168, %v141
      %vm225 = vcmp.eq.s32.totalorder %v168, %v142
      %vm226 = vcmp.eq.s32.totalorder %v169, %v141
      %vm227 = vcmp.eq.s32.totalorder %v169, %v142
      %vm228 = vcmp.eq.s32.totalorder %v170, %v141
      %vm229 = vcmp.eq.s32.totalorder %v170, %v142
      %vm230 = vcmp.eq.s32.totalorder %v171, %v141
      %vm231 = vcmp.eq.s32.totalorder %v171, %v142
      %vm232 = vcmp.eq.s32.totalorder %v172, %v141
      %vm233 = vcmp.eq.s32.totalorder %v172, %v142
      %vm234 = vcmp.eq.s32.totalorder %v173, %v141
      %vm235 = vcmp.eq.s32.totalorder %v173, %v142
      %vm236 = vcmp.eq.s32.totalorder %v174, %v141
      %vm237 = vcmp.eq.s32.totalorder %v174, %v142
      %vm238 = vcmp.eq.s32.totalorder %v175, %v141
      %vm239 = vcmp.eq.s32.totalorder %v175, %v142
      %v240 = vsel %vm176, 1, 0
      %v241 = vsel %vm177, 1, 0
      %v242 = vsel %vm178, 1, 0
      %v243 = vsel %vm179, 1, 0
      %v244 = vsel %vm180, 1, 0
      %v245 = vsel %vm181, 1, 0
      %v246 = vsel %vm182, 1, 0
      %v247 = vsel %vm183, 1, 0
      %v248 = vsel %vm184, 1, 0
      %v249 = vsel %vm185, 1, 0
      %v250 = vsel %vm186, 1, 0
      %v251 = vsel %vm187, 1, 0
      %v252 = vsel %vm188, 1, 0
      %v253 = vsel %vm189, 1, 0
      %v254 = vsel %vm190, 1, 0
      %v255 = vsel %vm191, 1, 0
      %v256 = vsel %vm192, 1, 0
      %v257 = vsel %vm193, 1, 0
      %v258 = vsel %vm194, 1, 0
      %v259 = vsel %vm195, 1, 0
      %v260 = vsel %vm196, 1, 0
      %v261 = vsel %vm197, 1, 0
      %v262 = vsel %vm198, 1, 0
      %v263 = vsel %vm199, 1, 0
      %v264 = vsel %vm200, 1, 0
      %v265 = vsel %vm201, 1, 0
      %v266 = vsel %vm202, 1, 0
      %v267 = vsel %vm203, 1, 0
      %v268 = vsel %vm204, 1, 0
      %v269 = vsel %vm205, 1, 0
      %v270 = vsel %vm206, 1, 0
      %v271 = vsel %vm207, 1, 0
      %v272 = vsel %vm208, 1, 0
      %v273 = vsel %vm209, 1, 0
      %v274 = vsel %vm210, 1, 0
      %v275 = vsel %vm211, 1, 0
      %v276 = vsel %vm212, 1, 0
      %v277 = vsel %vm213, 1, 0
      %v278 = vsel %vm214, 1, 0
      %v279 = vsel %vm215, 1, 0
      %v280 = vsel %vm216, 1, 0
      %v281 = vsel %vm217, 1, 0
      %v282 = vsel %vm218, 1, 0
      %v283 = vsel %vm219, 1, 0
      %v284 = vsel %vm220, 1, 0
      %v285 = vsel %vm221, 1, 0
      %v286 = vsel %vm222, 1, 0
      %v287 = vsel %vm223, 1, 0
      %v288 = vsel %vm224, 1, 0
      %v289 = vsel %vm225, 1, 0
      %v290 = vsel %vm226, 1, 0
      %v291 = vsel %vm227, 1, 0
      %v292 = vsel %vm228, 1, 0
      %v293 = vsel %vm229, 1, 0
      %v294 = vsel %vm230, 1, 0
      %v295 = vsel %vm231, 1, 0
      %v296 = vsel %vm232, 1, 0
      %v297 = vsel %vm233, 1, 0
      %v298 = vsel %vm234, 1, 0
      %v299 = vsel %vm235, 1, 0
      %v300 = vsel %vm236, 1, 0
      %v301 = vsel %vm237, 1, 0
      %v302 = vsel %vm238, 1, 0
      %v303 = vsel %vm239, 1, 0
      %v304 = vcvt.s32.f32 %v240
      %v305 = vcvt.s32.f32 %v241
      %v306 = vcvt.s32.f32 %v242
      %v307 = vcvt.s32.f32 %v243
      %v308 = vcvt.s32.f32 %v244
      %v309 = vcvt.s32.f32 %v245
      %v310 = vcvt.s32.f32 %v246
      %v311 = vcvt.s32.f32 %v247
      %v312 = vcvt.s32.f32 %v248
      %v313 = vcvt.s32.f32 %v249
      %v314 = vcvt.s32.f32 %v250
      %v315 = vcvt.s32.f32 %v251
      %v316 = vcvt.s32.f32 %v252
      %v317 = vcvt.s32.f32 %v253
      %v318 = vcvt.s32.f32 %v254
      %v319 = vcvt.s32.f32 %v255
      %v320 = vcvt.s32.f32 %v256
      %v321 = vcvt.s32.f32 %v257
      %v322 = vcvt.s32.f32 %v258
      %v323 = vcvt.s32.f32 %v259
      %v324 = vcvt.s32.f32 %v260
      %v325 = vcvt.s32.f32 %v261
      %v326 = vcvt.s32.f32 %v262
      %v327 = vcvt.s32.f32 %v263
      %v328 = vcvt.s32.f32 %v264
      %v329 = vcvt.s32.f32 %v265
      %v330 = vcvt.s32.f32 %v266
      %v331 = vcvt.s32.f32 %v267
      %v332 = vcvt.s32.f32 %v268
      %v333 = vcvt.s32.f32 %v269
      %v334 = vcvt.s32.f32 %v270
      %v335 = vcvt.s32.f32 %v271
      %v336 = vcvt.s32.f32 %v272
      %v337 = vcvt.s32.f32 %v273
      %v338 = vcvt.s32.f32 %v274
      %v339 = vcvt.s32.f32 %v275
      %v340 = vcvt.s32.f32 %v276
      %v341 = vcvt.s32.f32 %v277
      %v342 = vcvt.s32.f32 %v278
      %v343 = vcvt.s32.f32 %v279
      %v344 = vcvt.s32.f32 %v280
      %v345 = vcvt.s32.f32 %v281
      %v346 = vcvt.s32.f32 %v282
      %v347 = vcvt.s32.f32 %v283
      %v348 = vcvt.s32.f32 %v284
      %v349 = vcvt.s32.f32 %v285
      %v350 = vcvt.s32.f32 %v286
      %v351 = vcvt.s32.f32 %v287
      %v352 = vcvt.s32.f32 %v288
      %v353 = vcvt.s32.f32 %v289
      %v354 = vcvt.s32.f32 %v290
      %v355 = vcvt.s32.f32 %v291
      %v356 = vcvt.s32.f32 %v292
      %v357 = vcvt.s32.f32 %v293
      %v358 = vcvt.s32.f32 %v294
      %v359 = vcvt.s32.f32 %v295
      %v360 = vcvt.s32.f32 %v296
      %v361 = vcvt.s32.f32 %v297
      %v362 = vcvt.s32.f32 %v298
      %v363 = vcvt.s32.f32 %v299
      %v364 = vcvt.s32.f32 %v300
      %v365 = vcvt.s32.f32 %v301
      %v366 = vcvt.s32.f32 %v302
      %v367 = vcvt.s32.f32 %v303
      %368 = vst [vmem:[#allocation2] sm:$0xff] %v304
      %369 = vst [vmem:[#allocation2 + $0x8] sm:$0xff] %v305
      %370 = vst [vmem:[#allocation2 + $0x10] sm:$0xff] %v306
      %371 = vst [vmem:[#allocation2 + $0x18] sm:$0xff] %v307
      %372 = vst [vmem:[#allocation2 + $0x20] sm:$0xff] %v308
      %373 = vst [vmem:[#allocation2 + $0x28] sm:$0xff] %v309
      %374 = vst [vmem:[#allocation2 + $0x30] sm:$0xff] %v310
      %375 = vst [vmem:[#allocation2 + $0x38] sm:$0xff] %v311
      %376 = vst [vmem:[#allocation2 + $0x40] sm:$0xff] %v312
      %377 = vst [vmem:[#allocation2 + $0x48] sm:$0xff] %v313
      %378 = vst [vmem:[#allocation2 + $0x50] sm:$0xff] %v314
      %379 = vst [vmem:[#allocation2 + $0x58] sm:$0xff] %v315
      %380 = vst [vmem:[#allocation2 + $0x60] sm:$0xff] %v316
      %381 = vst [vmem:[#allocation2 + $0x68] sm:$0xff] %v317
      %382 = vst [vmem:[#allocation2 + $0x70] sm:$0xff] %v318
      %383 = vst [vmem:[#allocation2 + $0x78] sm:$0xff] %v319
      %384 = vst [vmem:[#allocation2 + $0x80] sm:$0xff] %v320
      %385 = vst [vmem:[#allocation2 + $0x88] sm:$0xff] %v321
      %386 = vst [vmem:[#allocation2 + $0x90] sm:$0xff] %v322
      %387 = vst [vmem:[#allocation2 + $0x98] sm:$0xff] %v323
      %388 = vst [vmem:[#allocation2 + $0xa0] sm:$0xff] %v324
      %389 = vst [vmem:[#allocation2 + $0xa8] sm:$0xff] %v325
      %390 = vst [vmem:[#allocation2 + $0xb0] sm:$0xff] %v326
      %391 = vst [vmem:[#allocation2 + $0xb8] sm:$0xff] %v327
      %392 = vst [vmem:[#allocation2 + $0xc0] sm:$0xff] %v328
      %393 = vst [vmem:[#allocation2 + $0xc8] sm:$0xff] %v329
      %394 = vst [vmem:[#allocation2 + $0xd0] sm:$0xff] %v330
      %395 = vst [vmem:[#allocation2 + $0xd8] sm:$0xff] %v331
      %396 = vst [vmem:[#allocation2 + $0xe0] sm:$0xff] %v332
      %397 = vst [vmem:[#allocation2 + $0xe8] sm:$0xff] %v333
      %398 = vst [vmem:[#allocation2 + $0xf0] sm:$0xff] %v334
      %399 = vst [vmem:[#allocation2 + $0xf8] sm:$0xff] %v335
      %400 = vst [vmem:[#allocation2 + $0x100] sm:$0xff] %v336
      %401 = vst [vmem:[#allocation2 + $0x108] sm:$0xff] %v337
      %402 = vst [vmem:[#allocation2 + $0x110] sm:$0xff] %v338
      %403 = vst [vmem:[#allocation2 + $0x118] sm:$0xff] %v339
      %404 = vst [vmem:[#allocation2 + $0x120] sm:$0xff] %v340
      %405 = vst [vmem:[#allocation2 + $0x128] sm:$0xff] %v341
      %406 = vst [vmem:[#allocation2 + $0x130] sm:$0xff] %v342
      %407 = vst [vmem:[#allocation2 + $0x138] sm:$0xff] %v343
      %408 = vst [vmem:[#allocation2 + $0x140] sm:$0xff] %v344
      %409 = vst [vmem:[#allocation2 + $0x148] sm:$0xff] %v345
      %410 = vst [vmem:[#allocation2 + $0x150] sm:$0xff] %v346
      %411 = vst [vmem:[#allocation2 + $0x158] sm:$0xff] %v347
      %412 = vst [vmem:[#allocation2 + $0x160] sm:$0xff] %v348
      %413 = vst [vmem:[#allocation2 + $0x168] sm:$0xff] %v349
      %414 = vst [vmem:[#allocation2 + $0x170] sm:$0xff] %v350
      %415 = vst [vmem:[#allocation2 + $0x178] sm:$0xff] %v351
      %416 = vst [vmem:[#allocation2 + $0x180] sm:$0xff] %v352
      %417 = vst [vmem:[#allocation2 + $0x188] sm:$0xff] %v353
      %418 = vst [vmem:[#allocation2 + $0x190] sm:$0xff] %v354
      %419 = vst [vmem:[#allocation2 + $0x198] sm:$0xff] %v355
      %420 = vst [vmem:[#allocation2 + $0x1a0] sm:$0xff] %v356
      %421 = vst [vmem:[#allocation2 + $0x1a8] sm:$0xff] %v357
      %422 = vst [vmem:[#allocation2 + $0x1b0] sm:$0xff] %v358
      %423 = vst [vmem:[#allocation2 + $0x1b8] sm:$0xff] %v359
      %424 = vst [vmem:[#allocation2 + $0x1c0] sm:$0xff] %v360
      %425 = vst [vmem:[#allocation2 + $0x1c8] sm:$0xff] %v361
      %426 = vst [vmem:[#allocation2 + $0x1d0] sm:$0xff] %v362
      %427 = vst [vmem:[#allocation2 + $0x1d8] sm:$0xff] %v363
      %428 = vst [vmem:[#allocation2 + $0x1e0] sm:$0xff] %v364
      %429 = vst [vmem:[#allocation2 + $0x1e8] sm:$0xff] %v365
      %430 = vst [vmem:[#allocation2 + $0x1f0] sm:$0xff] %v366
      %431 = vst [vmem:[#allocation2 + $0x1f8] sm:$0xff] %v367
    $region21: #{tpu_custom_call.1} parent=1 // pred_fallthru
      _
    %v432 = vld [vmem:[#allocation7] sm:$0xff]
    %v433 = vld [vmem:[#allocation7 + $0x8] sm:$0xff]
    %v434 = vld [vmem:[#allocation2] sm:$0xff]
    %v435 = vld [vmem:[#allocation2 + $0x8] sm:$0xff]
    %v436 = vld [vmem:[#allocation2 + $0x10] sm:$0xff]
    %v437 = vld [vmem:[#allocation2 + $0x18] sm:$0xff]
    %v438 = vld [vmem:[#allocation2 + $0x20] sm:$0xff]
    %v439 = vld [vmem:[#allocation2 + $0x28] sm:$0xff]
    %v440 = vld [vmem:[#allocation2 + $0x30] sm:$0xff]
    %v441 = vld [vmem:[#allocation2 + $0x38] sm:$0xff]
    %v442 = vld [vmem:[#allocation2 + $0x40] sm:$0xff]
    %v443 = vld [vmem:[#allocation2 + $0x48] sm:$0xff]
    %v444 = vld [vmem:[#allocation2 + $0x50] sm:$0xff]
    %v445 = vld [vmem:[#allocation2 + $0x58] sm:$0xff]
    %v446 = vld [vmem:[#allocation2 + $0x60] sm:$0xff]
    %v447 = vld [vmem:[#allocation2 + $0x68] sm:$0xff]
    %v448 = vld [vmem:[#allocation2 + $0x70] sm:$0xff]
    %v449 = vld [vmem:[#allocation2 + $0x78] sm:$0xff]
    %v450 = vld [vmem:[#allocation2 + $0x80] sm:$0xff]
    %v451 = vld [vmem:[#allocation2 + $0x88] sm:$0xff]
    %v452 = vld [vmem:[#allocation2 + $0x90] sm:$0xff]
    %v453 = vld [vmem:[#allocation2 + $0x98] sm:$0xff]
    %v454 = vld [vmem:[#allocation2 + $0xa0] sm:$0xff]
    %v455 = vld [vmem:[#allocation2 + $0xa8] sm:$0xff]
    %v456 = vld [vmem:[#allocation2 + $0xb0] sm:$0xff]
    %v457 = vld [vmem:[#allocation2 + $0xb8] sm:$0xff]
    %v458 = vld [vmem:[#allocation2 + $0xc0] sm:$0xff]
    %v459 = vld [vmem:[#allocation2 + $0xc8] sm:$0xff]
    %v460 = vld [vmem:[#allocation2 + $0xd0] sm:$0xff]
    %v461 = vld [vmem:[#allocation2 + $0xd8] sm:$0xff]
    %v462 = vld [vmem:[#allocation2 + $0xe0] sm:$0xff]
    %v463 = vld [vmem:[#allocation2 + $0xe8] sm:$0xff]
    %v464 = vld [vmem:[#allocation2 + $0xf0] sm:$0xff]
    %v465 = vld [vmem:[#allocation2 + $0xf8] sm:$0xff]
    %v466 = vld [vmem:[#allocation2 + $0x100] sm:$0xff]
    %v467 = vld [vmem:[#allocation2 + $0x108] sm:$0xff]
    %v468 = vld [vmem:[#allocation2 + $0x110] sm:$0xff]
    %v469 = vld [vmem:[#allocation2 + $0x118] sm:$0xff]
    %v470 = vld [vmem:[#allocation2 + $0x120] sm:$0xff]
    %v471 = vld [vmem:[#allocation2 + $0x128] sm:$0xff]
    %v472 = vld [vmem:[#allocation2 + $0x130] sm:$0xff]
    %v473 = vld [vmem:[#allocation2 + $0x138] sm:$0xff]
    %v474 = vld [vmem:[#allocation2 + $0x140] sm:$0xff]
    %v475 = vld [vmem:[#allocation2 + $0x148] sm:$0xff]
    %v476 = vld [vmem:[#allocation2 + $0x150] sm:$0xff]
    %v477 = vld [vmem:[#allocation2 + $0x158] sm:$0xff]
    %v478 = vld [vmem:[#allocation2 + $0x160] sm:$0xff]
    %v479 = vld [vmem:[#allocation2 + $0x168] sm:$0xff]
    %v480 = vld [vmem:[#allocation2 + $0x170] sm:$0xff]
    %v481 = vld [vmem:[#allocation2 + $0x178] sm:$0xff]
    %v482 = vld [vmem:[#allocation2 + $0x180] sm:$0xff]
    %v483 = vld [vmem:[#allocation2 + $0x188] sm:$0xff]
    %v484 = vld [vmem:[#allocation2 + $0x190] sm:$0xff]
    %v485 = vld [vmem:[#allocation2 + $0x198] sm:$0xff]
    %v486 = vld [vmem:[#allocation2 + $0x1a0] sm:$0xff]
    %v487 = vld [vmem:[#allocation2 + $0x1a8] sm:$0xff]
    %v488 = vld [vmem:[#allocation2 + $0x1b0] sm:$0xff]
    %v489 = vld [vmem:[#allocation2 + $0x1b8] sm:$0xff]
    %v490 = vld [vmem:[#allocation2 + $0x1c0] sm:$0xff]
    %v491 = vld [vmem:[#allocation2 + $0x1c8] sm:$0xff]
    %v492 = vld [vmem:[#allocation2 + $0x1d0] sm:$0xff]
    %v493 = vld [vmem:[#allocation2 + $0x1d8] sm:$0xff]
    %v494 = vld [vmem:[#allocation2 + $0x1e0] sm:$0xff]
    %v495 = vld [vmem:[#allocation2 + $0x1e8] sm:$0xff]
    %v496 = vld [vmem:[#allocation2 + $0x1f0] sm:$0xff]
    %v497 = vld [vmem:[#allocation2 + $0x1f8] sm:$0xff]
    %498 = vmatpush.msra.mxu0 %v464
    %499 = vmatpush.msra.mxu0 %v462
    %500 = vmatpush.msra.mxu0 %v460
    %501 = vmatpush.msra.mxu0 %v458
    %502 = vmatpush.msra.mxu0 %v456
    %503 = vmatpush.msra.mxu0 %v454
    %504 = vmatpush.msra.mxu0 %v452
    %505 = vmatpush.msra.mxu0 %v450
    %506 = vmatpush.msra.mxu0 %v448
    %507 = vmatpush.msra.mxu0 %v446
    %508 = vmatpush.msra.mxu0 %v444
    %509 = vmatpush.msra.mxu0 %v442
    %510 = vmatpush.msra.mxu0 %v440
    %511 = vmatpush.msra.mxu0 %v438
    %512 = vmatpush.msra.mxu0 %v436
    %513 = vmatpush.msra.mxu0 %v434
    %514 = vmatmul.f32.gmra.mxu0 %v432
    %v515 = vpop.f32.mrf.mxu0
    %v516 = vadd.f32 0.0, %v515
    %517 = vdwg.mxu0
    %518 = vmatpush.msra.mxu0 %v496
    %519 = vmatpush.msra.mxu0 %v494
    %520 = vmatpush.msra.mxu0 %v492
    %521 = vmatpush.msra.mxu0 %v490
    %522 = vmatpush.msra.mxu0 %v488
    %523 = vmatpush.msra.mxu0 %v486
    %524 = vmatpush.msra.mxu0 %v484
    %525 = vmatpush.msra.mxu0 %v482
    %526 = vmatpush.msra.mxu0 %v480
    %527 = vmatpush.msra.mxu0 %v478
    %528 = vmatpush.msra.mxu0 %v476
    %529 = vmatpush.msra.mxu0 %v474
    %530 = vmatpush.msra.mxu0 %v472
    %531 = vmatpush.msra.mxu0 %v470
    %532 = vmatpush.msra.mxu0 %v468
    %533 = vmatpush.msra.mxu0 %v466
    %534 = vmatmul.f32.gmra.mxu0 %v433
    %v535 = vpop.f32.mrf.mxu0
    %v536 = vadd.f32 %v516, %v535
    %537 = vdwg.mxu0
    %538 = vmatpush.msra.mxu0 %v465
    %539 = vmatpush.msra.mxu0 %v463
    %540 = vmatpush.msra.mxu0 %v461
    %541 = vmatpush.msra.mxu0 %v459
    %542 = vmatpush.msra.mxu0 %v457
    %543 = vmatpush.msra.mxu0 %v455
    %544 = vmatpush.msra.mxu0 %v453
    %545 = vmatpush.msra.mxu0 %v451
    %546 = vmatpush.msra.mxu0 %v449
    %547 = vmatpush.msra.mxu0 %v447
    %548 = vmatpush.msra.mxu0 %v445
    %549 = vmatpush.msra.mxu0 %v443
    %550 = vmatpush.msra.mxu0 %v441
    %551 = vmatpush.msra.mxu0 %v439
    %552 = vmatpush.msra.mxu0 %v437
    %553 = vmatpush.msra.mxu0 %v435
    %554 = vmatmul.f32.gmra.mxu0 %v432
    %v555 = vpop.f32.mrf.mxu0
    %v556 = vadd.f32 0.0, %v555
    %557 = vdwg.mxu0
    %558 = vmatpush.msra.mxu0 %v497
    %559 = vmatpush.msra.mxu0 %v495
    %560 = vmatpush.msra.mxu0 %v493
    %561 = vmatpush.msra.mxu0 %v491
    %562 = vmatpush.msra.mxu0 %v489
    %563 = vmatpush.msra.mxu0 %v487
    %564 = vmatpush.msra.mxu0 %v485
    %565 = vmatpush.msra.mxu0 %v483
    %566 = vmatpush.msra.mxu0 %v481
    %567 = vmatpush.msra.mxu0 %v479
    %568 = vmatpush.msra.mxu0 %v477
    %569 = vmatpush.msra.mxu0 %v475
    %570 = vmatpush.msra.mxu0 %v473
    %571 = vmatpush.msra.mxu0 %v471
    %572 = vmatpush.msra.mxu0 %v469
    %573 = vmatpush.msra.mxu0 %v467
    %574 = vmatmul.f32.gmra.mxu0 %v433
    %v575 = vpop.f32.mrf.mxu0
    %v576 = vadd.f32 %v556, %v575
    %577 = vdwg.mxu0
    %578 = vst [vmem:[#allocation8] sm:$0xff] %v536
    %579 = vst [vmem:[#allocation8 + $0x8] sm:$0xff] %v576
    // Predicated region
    $region22: #{tpu_custom_call.1} parent=1 // pred_check
      _
    $region23: #{tpu_custom_call.1} parent=1 // pred_check_branch
      %581 = sbr.rel (0) target = $region25
    $region24: #{tpu_custom_call.1} parent=1 // pred_region
      %583 = vsyncadd [#allocation5], 0
      %s585 = sshll.u32 [#allocation8], 4
      %s586 = int_to_ptr.vmem [resolvable:$true] %s585
      %s587 = sshll.u32 %s2, 4
      %s588 = int_to_ptr.hbm [resolvable:$true] %s587
      %590 = dma.vmem_to_hbm [thread:$0]  %s586, 256, %s588, [#allocation5]
    $region25: #{tpu_custom_call.1} parent=1 // pred_fallthru
      _
    // Predicated region
    $region26: #{tpu_custom_call.1} parent=1 // pred_check
      _
    $region27: #{tpu_custom_call.1} parent=1 // pred_check_branch
      %592 = sbr.rel (0) target = $region29
    $region28: #{tpu_custom_call.1} parent=1 // pred_region
      %594 = dma.done [#allocation5], 256
    $region29: #{tpu_custom_call.1} parent=1 // pred_fallthru
      _
    %595 = vsyncpa [#allocation4], 1
    %596 = vsyncpa [#allocation5], 1
    %597 = vsyncpa [#allocation6], 1

</llo_original>
